<compile_context>
chip_gen: v5e
topology: v5e:2x2
jax: 0.10.0
libtpu: 0.0.40
codegen_flags: <defaults>
</compile_context>

<pallas_src>
import functools
import math

import numpy as np
import jax
import jax.numpy as jnp
from jax.experimental import pallas as pl
from jax.experimental.pallas import tpu as pltpu


# ----------------------------- kernels ---------------------------------------


def _proj_kernel(msa0_ref, pos1d_ref,
                 ws_ref, bs_ref, wp2_ref, bp2_ref, bm_ref,
                 wq_ref, bq_ref, wk_ref, bk_ref,
                 sp_ref, sq_ref, sk_ref):
    """Grid-invariant projections (runs once, grid-less).

    sp = msa[0] @ Ws + bs + pos1d @ Wp2 + bp2 + bm   (msalinear bias folded in)
    sq = msa[0] @ Wq + bq
    sk = msa[0] @ Wk + bk
    """
    m0 = msa0_ref[...]
    sp_ref[...] = (jnp.dot(m0, ws_ref[...], preferred_element_type=jnp.float32)
                   + bs_ref[...]
                   + jnp.dot(pos1d_ref[...], wp2_ref[...],
                             preferred_element_type=jnp.float32)
                   + bp2_ref[...]
                   + bm_ref[...])
    sq_ref[...] = (jnp.dot(m0, wq_ref[...], preferred_element_type=jnp.float32)
                   + bq_ref[...])
    sk_ref[...] = (jnp.dot(m0, wk_ref[...], preferred_element_type=jnp.float32)
                   + bk_ref[...])


def _m_kernel(msa_ref, wm_ref, sp_ref, m_out_ref, *, tn, L):
    """m[n] = msa[n] @ Wm + (bm + s + p) for a block of `tn` sequences, computed as a
    single (tn*L, D) x (D, m_dim) MXU matmul + one broadcast add."""
    D = msa_ref.shape[-1]
    m_dim = m_out_ref.shape[-1]
    x = msa_ref[...].reshape(tn * L, D)
    y = jnp.dot(x, wm_ref[...], preferred_element_type=jnp.float32)
    m_out_ref[...] = y.reshape(tn, L, m_dim) + sp_ref[...][None, :, :]


def _z_kernel(sq_ref, sk_ref, ewin_ref, z_out_ref, *, tr, L):
    """z[i0+r, j] = sq[j] + sk[i0+r] + E[(j - (i0+r)) + (L-1)], r in [0, tr).

    ewin_ref holds this block's pre-gathered window of the relative-offset table
    (rows (L-1)-(i0+tr-1) .. (L-1)-i0 + (L-1)); row r's positional term is the static
    slice win[tr-1-r : tr-1-r+L].  The whole (tr, L, z) block is produced with one
    vectorized broadcast-add and a single store.
    """
    sq = sq_ref[...]                 # (L, z)       grid-invariant (resident)
    sk_blk = sk_ref[0]               # (tr, z)      rows of this block (streamed)
    win = ewin_ref[0]                # (L+tr-1, z)  E window of this block (streamed)
    pos = jnp.stack(
        [win[tr - 1 - r: tr - 1 - r + L, :] for r in range(tr)], axis=0)  # (tr, L, z)
    z_out_ref[...] = pos + sq[None, :, :] + sk_blk[:, None, :]


# ----------------------------- helpers ---------------------------------------


def _compute_pos1d(L):
    # (arange(L)[:,None] & (1 << arange(14))) > 0 -> float32  (14-bit encoding)
    bits = (jnp.arange(L, dtype=jnp.int32)[:, None]
            & (1 << jnp.arange(14, dtype=jnp.int32))[None, :]) > 0
    return bits.astype(jnp.float32)                          # (L, 14)


def _compute_pos2d(L):
    # Only used by the pure-JAX reference.  The Pallas path never materializes this.
    a = jnp.arange(L, dtype=jnp.int32)
    rel = jnp.clip(a[None, :] - a[:, None], -64, 64) + 64
    return jax.nn.one_hot(rel, 129, dtype=jnp.float32)       # (L, L, 129)


def _relpos_table(L, wpos, bpos):
    # one_hot(r) @ Wpos + bpos == Wpos[r] + bpos.  Expand the 129-row projection table
    # into a (2L-1, z_dim) relative-offset table: E[k] = T[clip(k-(L-1),-64,64)+64].
    t = wpos + bpos                                           # (129, z_dim)
    offs = jnp.clip(jnp.arange(2 * L - 1, dtype=jnp.int32) - (L - 1), -64, 64) + 64
    return t[offs]                                            # (2L-1, z_dim)


def _vmem_budgets():
    """(streamed-tile budget, vmem_limit_bytes), derived from physical VMEM.

    ~55% of physical for double-buffered streamed tiles (v7x: ~35 MiB of 64; v5e/v6e:
    ~70 MiB of 128), and a matching vmem_limit at ~75% (always <= physical)."""
    phys = 64 * 1024 * 1024          # conservative default (v7x per-TC VMEM)
    try:
        phys = int(pltpu.get_tpu_info().vmem_capacity_bytes)
    except Exception:
        pass
    return int(phys * 0.55), int(phys * 0.75)


def _pick_block(count, per_item_bytes, resident_bytes, budget_bytes):
    """Largest block that fits the (double-buffered) VMEM budget while keeping at least
    2 grid steps whenever count >= 2, so both v7x TensorCores get work."""
    avail = max(0, budget_bytes - 2 * resident_bytes)
    t = max(1, avail // max(1, 2 * per_item_bytes))
    if count >= 2:
        t = min(t, count // 2)
    return int(max(1, min(t, count)))


# ----------------------------- wrapper ---------------------------------------


def msa_encoder_forward(msa, params):
    N, L, D = msa.shape
    m_dim = params["wm"].shape[1]
    z_dim = params["wq"].shape[1]
    f32 = jnp.float32

    pos1d = _compute_pos1d(L)                                 # (L, 14)
    msa0 = msa[0]                                             # (L, D)

    # ---- hoisted grid-invariant projections (single grid-less pallas_call) ----
    sp, sq, sk = pl.pallas_call(
        _proj_kernel,
        out_shape=(jax.ShapeDtypeStruct((L, m_dim), f32),
                   jax.ShapeDtypeStruct((L, z_dim), f32),
                   jax.ShapeDtypeStruct((L, z_dim), f32)),
    )(msa0, pos1d,
      params["ws"], params["bs"], params["wp2"], params["bp2"], params["bm"],
      params["wq"], params["bq"], params["wk"], params["bk"])

    tile_budget, vmem_limit = _vmem_budgets()

    # ================== m = msa @ Wm + (bm + s + p), grid over N ==================
    per_seq_bytes = 4 * L * (D + m_dim)                 # streamed in + out per sequence
    resident_m = 4 * (D * m_dim + L * m_dim)            # Wm + sp (resident)
    tn = _pick_block(N, per_seq_bytes, resident_m, tile_budget)
    Np = int(math.ceil(N / tn) * tn)
    msa_p = msa if Np == N else jnp.pad(msa, ((0, Np - N), (0, 0), (0, 0)))
    # TODO(synk): for very large L*D add an optional L-tiling grid axis (block (tn, tl, D))
    # instead of letting tn collapse to 1; bf16 inputs with f32 accumulation are a further
    # opt-in bandwidth/MXU win if the model tolerates it.

    m_cost = pl.CostEstimate(
        flops=2 * Np * L * D * m_dim, transcendentals=0,
        bytes_accessed=4 * (Np * L * (D + m_dim) + D * m_dim + L * m_dim))
    m = pl.pallas_call(
        functools.partial(_m_kernel, tn=tn, L=L),
        out_shape=jax.ShapeDtypeStruct((Np, L, m_dim), f32),
        grid_spec=pltpu.PrefetchScalarGridSpec(
            num_scalar_prefetch=0,
            grid=(Np // tn,),
            in_specs=[
                pl.BlockSpec((tn, L, D), lambda n: (n, 0, 0)),    # msa block (streamed)
                pl.BlockSpec((D, m_dim), lambda n: (0, 0)),       # Wm (resident)
                pl.BlockSpec((L, m_dim), lambda n: (0, 0)),       # sp (resident)
            ],
            out_specs=pl.BlockSpec((tn, L, m_dim), lambda n: (n, 0, 0)),
        ),
        compiler_params=pltpu.CompilerParams(
            dimension_semantics=("parallel",),
            vmem_limit_bytes=vmem_limit),
        cost_estimate=m_cost,
    )(msa_p, params["wm"], sp)
    if Np != N:
        m = m[:N]

    # ============ z[i,j] = sq[j] + sk[i] + E[(j-i)+(L-1)], grid over rows i ============
    per_row_bytes = 4 * z_dim * (2 * L + 1)     # z out row + (amortized) E window + sk row
    resident_z = 4 * L * z_dim                  # sq (resident)
    tr = _pick_block(L, per_row_bytes, resident_z, tile_budget)
    Lp = int(math.ceil(L / tr) * tr)
    nblk = Lp // tr

    sq_p = sq if Lp == L else jnp.pad(sq, ((0, Lp - L), (0, 0)))
    sk_p = sk if Lp == L else jnp.pad(sk, ((0, Lp - L), (0, 0)))
    sk_blk = sk_p.reshape(nblk, tr, z_dim)

    # Relative-offset table for padded length Lp, pre-windowed per row block so the kernel
    # only ever does static slices.  Window start for block b is (Lp - tr) - b*tr.
    e_tab = _relpos_table(Lp, params["wpos"], params["bpos"])            # (2Lp-1, z)
    starts = (Lp - tr) - tr * jnp.arange(nblk, dtype=jnp.int32)          # (nblk,)
    widx = starts[:, None] + jnp.arange(Lp + tr - 1, dtype=jnp.int32)[None, :]
    e_win = e_tab[widx]                                                  # (nblk, Lp+tr-1, z)

    z_cost = pl.CostEstimate(
        flops=2 * Lp * Lp * z_dim, transcendentals=0,
        bytes_accessed=4 * z_dim * (Lp * Lp + nblk * (Lp + tr - 1) + 2 * Lp))
    z = pl.pallas_call(
        functools.partial(_z_kernel, tr=tr, L=Lp),
        out_shape=jax.ShapeDtypeStruct((Lp, Lp, z_dim), f32),
        grid_spec=pltpu.PrefetchScalarGridSpec(
            num_scalar_prefetch=0,
            grid=(nblk,),
            in_specs=[
                pl.BlockSpec((Lp, z_dim), lambda i: (0, 0)),               # sq (resident)
                pl.BlockSpec((1, tr, z_dim), lambda i: (i, 0, 0)),         # sk rows (streamed)
                pl.BlockSpec((1, Lp + tr - 1, z_dim), lambda i: (i, 0, 0)),  # E window (streamed)
            ],
            out_specs=pl.BlockSpec((tr, Lp, z_dim), lambda i: (i, 0, 0)),
        ),
        compiler_params=pltpu.CompilerParams(
            dimension_semantics=("parallel",),
            vmem_limit_bytes=vmem_limit),
        cost_estimate=z_cost,
    )(sq_p, sk_blk, e_win)
    if Lp != L:
        z = z[:L, :L]

    return m, z


# ----------------------------- params / reference ----------------------------


def init_params(key, msa_dim, m_dim, z_dim):
    ks = jax.random.split(key, 12)

    def lin(kw, kb, fin, fout):
        w = (jax.random.normal(kw, (fin, fout), jnp.float32)
             / np.sqrt(np.float32(fin)))
        b = jax.random.normal(kb, (1, fout), jnp.float32) * 0.01
        return w, b

    wm, bm = lin(ks[0], ks[1], msa_dim, m_dim)      # msalinear
    wq, bq = lin(ks[2], ks[3], msa_dim, z_dim)      # qlinear
    wk, bk = lin(ks[4], ks[5], msa_dim, z_dim)      # klinear
    ws, bs = lin(ks[6], ks[7], msa_dim, m_dim)      # slinear
    wpos, bpos = lin(ks[8], ks[9], 129, z_dim)      # poslinear
    wp2, bp2 = lin(ks[10], ks[11], 14, m_dim)       # poslinear2
    return dict(wm=wm, bm=bm, wq=wq, bq=bq, wk=wk, bk=bk,
                ws=ws, bs=bs, wpos=wpos, bpos=bpos, wp2=wp2, bp2=bp2)


def reference_forward(msa, params):
    N, L, D = msa.shape
    pos1d = _compute_pos1d(L)
    pos2d = _compute_pos2d(L)
    s = msa[0] @ params["ws"] + params["bs"]
    m = msa @ params["wm"] + params["bm"]
    p = pos1d @ params["wp2"] + params["bp2"]
    m = m + s[None, :, :] + p[None, :, :]
    sq = msa[0] @ params["wq"] + params["bq"]
    sk = msa[0] @ params["wk"] + params["bk"]
    z = sq[None, :, :] + sk[:, None, :]
    z = z + pos2d @ params["wpos"] + params["bpos"]
    return m, z


# ----------------------------- main -------------------------------------------


if __name__ == "__main__":
    N, L, msa_dim, m_dim, z_dim = 2, 8, 16, 32, 32

    key = jax.random.PRNGKey(0)
    kx, kp = jax.random.split(key)
    msa = jax.random.normal(kx, (N, L, msa_dim), jnp.float32)
    params = init_params(kp, msa_dim, m_dim, z_dim)

    m, z = msa_encoder_forward(msa, params)
    jax.block_until_ready((m, z))

    m_ref, z_ref = reference_forward(msa, params)
    assert m.shape == (N, L, m_dim) and z.shape == (L, L, z_dim)
    assert np.allclose(np.asarray(m), np.asarray(m_ref), atol=1e-4, rtol=1e-4)
    assert np.allclose(np.asarray(z), np.asarray(z_ref), atol=1e-4, rtol=1e-4)

    print("KERNEL_OK")
</pallas_src>

<mosaic_0001>
module attributes {stable_mosaic.version = 11 : i64} {
  func.func @_proj_kernel(%arg0: memref<8x16xf32, #tpu.memory_space<vmem>>, %arg1: memref<8x14xf32, #tpu.memory_space<vmem>>, %arg2: memref<16x32xf32, #tpu.memory_space<vmem>>, %arg3: memref<1x32xf32, #tpu.memory_space<vmem>>, %arg4: memref<14x32xf32, #tpu.memory_space<vmem>>, %arg5: memref<1x32xf32, #tpu.memory_space<vmem>>, %arg6: memref<1x32xf32, #tpu.memory_space<vmem>>, %arg7: memref<16x32xf32, #tpu.memory_space<vmem>>, %arg8: memref<1x32xf32, #tpu.memory_space<vmem>>, %arg9: memref<16x32xf32, #tpu.memory_space<vmem>>, %arg10: memref<1x32xf32, #tpu.memory_space<vmem>>, %arg11: memref<8x32xf32, #tpu.memory_space<vmem>>, %arg12: memref<8x32xf32, #tpu.memory_space<vmem>>, %arg13: memref<8x32xf32, #tpu.memory_space<vmem>>) attributes {dimension_semantics = [], scalar_prefetch = 0 : i64, scratch_operands = 0 : i64, tpu.core_type = #tpu.core_type<tc>} {
    %c0 = arith.constant 0 : index
    %c0_0 = arith.constant 0 : index
    %0 = vector.load %arg0[%c0, %c0_0] : memref<8x16xf32, #tpu.memory_space<vmem>>, vector<8x16xf32>
    %c0_1 = arith.constant 0 : index
    %c0_2 = arith.constant 0 : index
    %1 = vector.load %arg2[%c0_1, %c0_2] : memref<16x32xf32, #tpu.memory_space<vmem>>, vector<16x32xf32>
    %cst = arith.constant dense<0.000000e+00> : vector<8x32xf32>
    %2 = tpu.matmul %0, %1, %cst {dimension_numbers = #tpu.dot_dimension_numbers<[1], [0], [0], [1], [0, 0, 1, 1], [], []>} : vector<8x16xf32>, vector<16x32xf32>, vector<8x32xf32> -> vector<8x32xf32>
    %c0_3 = arith.constant 0 : index
    %c0_4 = arith.constant 0 : index
    %3 = vector.load %arg3[%c0_3, %c0_4] : memref<1x32xf32, #tpu.memory_space<vmem>>, vector<1x32xf32>
    %4 = vector.broadcast %3 : vector<1x32xf32> to vector<8x32xf32>
    %5 = arith.addf %2, %4 : vector<8x32xf32>
    %c0_5 = arith.constant 0 : index
    %c0_6 = arith.constant 0 : index
    %6 = vector.load %arg1[%c0_5, %c0_6] : memref<8x14xf32, #tpu.memory_space<vmem>>, vector<8x14xf32>
    %c0_7 = arith.constant 0 : index
    %c0_8 = arith.constant 0 : index
    %7 = vector.load %arg4[%c0_7, %c0_8] : memref<14x32xf32, #tpu.memory_space<vmem>>, vector<14x32xf32>
    %cst_9 = arith.constant dense<0.000000e+00> : vector<8x32xf32>
    %8 = tpu.matmul %6, %7, %cst_9 {dimension_numbers = #tpu.dot_dimension_numbers<[1], [0], [0], [1], [0, 0, 1, 1], [], []>} : vector<8x14xf32>, vector<14x32xf32>, vector<8x32xf32> -> vector<8x32xf32>
    %9 = arith.addf %5, %8 : vector<8x32xf32>
    %c0_10 = arith.constant 0 : index
    %c0_11 = arith.constant 0 : index
    %10 = vector.load %arg5[%c0_10, %c0_11] : memref<1x32xf32, #tpu.memory_space<vmem>>, vector<1x32xf32>
    %11 = vector.broadcast %10 : vector<1x32xf32> to vector<8x32xf32>
    %12 = arith.addf %9, %11 : vector<8x32xf32>
    %c0_12 = arith.constant 0 : index
    %c0_13 = arith.constant 0 : index
    %13 = vector.load %arg6[%c0_12, %c0_13] : memref<1x32xf32, #tpu.memory_space<vmem>>, vector<1x32xf32>
    %14 = vector.broadcast %13 : vector<1x32xf32> to vector<8x32xf32>
    %15 = arith.addf %12, %14 : vector<8x32xf32>
    %c0_14 = arith.constant 0 : index
    %c0_15 = arith.constant 0 : index
    %16 = vector.load %arg11[%c0_14, %c0_15] : memref<8x32xf32, #tpu.memory_space<vmem>>, vector<8x32xf32>
    tpu.vector_store %arg11[%c0_14, %c0_15], %15 {strides = array<i32>} : memref<8x32xf32, #tpu.memory_space<vmem>>, vector<8x32xf32>,
    %c0_16 = arith.constant 0 : index
    %c0_17 = arith.constant 0 : index
    %17 = vector.load %arg7[%c0_16, %c0_17] : memref<16x32xf32, #tpu.memory_space<vmem>>, vector<16x32xf32>
    %cst_18 = arith.constant dense<0.000000e+00> : vector<8x32xf32>
    %18 = tpu.matmul %0, %17, %cst_18 {dimension_numbers = #tpu.dot_dimension_numbers<[1], [0], [0], [1], [0, 0, 1, 1], [], []>} : vector<8x16xf32>, vector<16x32xf32>, vector<8x32xf32> -> vector<8x32xf32>
    %c0_19 = arith.constant 0 : index
    %c0_20 = arith.constant 0 : index
    %19 = vector.load %arg8[%c0_19, %c0_20] : memref<1x32xf32, #tpu.memory_space<vmem>>, vector<1x32xf32>
    %20 = vector.broadcast %19 : vector<1x32xf32> to vector<8x32xf32>
    %21 = arith.addf %18, %20 : vector<8x32xf32>
    %c0_21 = arith.constant 0 : index
    %c0_22 = arith.constant 0 : index
    %22 = vector.load %arg12[%c0_21, %c0_22] : memref<8x32xf32, #tpu.memory_space<vmem>>, vector<8x32xf32>
    tpu.vector_store %arg12[%c0_21, %c0_22], %21 {strides = array<i32>} : memref<8x32xf32, #tpu.memory_space<vmem>>, vector<8x32xf32>,
    %c0_23 = arith.constant 0 : index
    %c0_24 = arith.constant 0 : index
    %23 = vector.load %arg9[%c0_23, %c0_24] : memref<16x32xf32, #tpu.memory_space<vmem>>, vector<16x32xf32>
    %cst_25 = arith.constant dense<0.000000e+00> : vector<8x32xf32>
    %24 = tpu.matmul %0, %23, %cst_25 {dimension_numbers = #tpu.dot_dimension_numbers<[1], [0], [0], [1], [0, 0, 1, 1], [], []>} : vector<8x16xf32>, vector<16x32xf32>, vector<8x32xf32> -> vector<8x32xf32>
    %c0_26 = arith.constant 0 : index
    %c0_27 = arith.constant 0 : index
    %25 = vector.load %arg10[%c0_26, %c0_27] : memref<1x32xf32, #tpu.memory_space<vmem>>, vector<1x32xf32>
    %26 = vector.broadcast %25 : vector<1x32xf32> to vector<8x32xf32>
    %27 = arith.addf %24, %26 : vector<8x32xf32>
    %c0_28 = arith.constant 0 : index
    %c0_29 = arith.constant 0 : index
    %28 = vector.load %arg13[%c0_28, %c0_29] : memref<8x32xf32, #tpu.memory_space<vmem>>, vector<8x32xf32>
    tpu.vector_store %arg13[%c0_28, %c0_29], %27 {strides = array<i32>} : memref<8x32xf32, #tpu.memory_space<vmem>>, vector<8x32xf32>,
    return
  }
}

</mosaic_0001>

<llo_original>
// kernel: tpu_custom_call.1
$region0: #{tpu_custom_call.1}
  #allocation0 [shape = 'u32[]', space=smem, size = 0x4, offset = 0x4, fixed_abs, tag = 'smem constant byte address 0x4 - core index']
  #allocation1 [shape = 'u32[72,128]{1,0:T(1,128)}', space=vmem, size = 0x9000, scoped, tag = 'internal scratch']
  %s0 = inlined_call_operand.hbm [shape: f32[8,16], index: 0, kind: input, shape index: {}]
  %s1 = inlined_call_operand.hbm [shape: f32[8,14], index: 1, kind: input, shape index: {}]
  %s2 = inlined_call_operand.hbm [shape: f32[16,32], index: 2, kind: input, shape index: {}]
  %s3 = inlined_call_operand.vmem [shape: f32[1,32], index: 3, kind: input, shape index: {}]
  %s4 = inlined_call_operand.hbm [shape: f32[14,32], index: 4, kind: input, shape index: {}]
  %s5 = inlined_call_operand.vmem [shape: f32[1,32], index: 5, kind: input, shape index: {}]
  %s6 = inlined_call_operand.vmem [shape: f32[1,32], index: 6, kind: input, shape index: {}]
  %s7 = inlined_call_operand.hbm [shape: f32[16,32], index: 7, kind: input, shape index: {}]
  %s8 = inlined_call_operand.vmem [shape: f32[1,32], index: 8, kind: input, shape index: {}]
  %s9 = inlined_call_operand.hbm [shape: f32[16,32], index: 9, kind: input, shape index: {}]
  %s10 = inlined_call_operand.vmem [shape: f32[1,32], index: 10, kind: input, shape index: {}]
  %s11 = inlined_call_operand.hbm [shape: f32[8,32], index: 11, kind: output, shape index: {0}]
  %s12 = inlined_call_operand.hbm [shape: f32[8,32], index: 12, kind: output, shape index: {1}]
  %s13 = inlined_call_operand.hbm [shape: f32[8,32], index: 13, kind: output, shape index: {2}]
  %14 = xla_tuple %s11, %s12, %s13
  %s15 = sld [smem:[#allocation0]]
  $region94: #{tpu_custom_call.1} parent=0
    _
  %s17 = ssub.s32 1, %s15
  %s18 = scalar_select 0, %s17, %s15
  $region1: #{tpu_custom_call.1} parent=0
    #allocation2 [shape = 'u8[4096]{0}', space=vmem, size = 0x1000, scoped, tag = 'input window, operand 0, single buffered']
    #allocation3 [shape = 's32[1]{0}', space=sflag, size = 0x4, scoped, tag = 'scoped memory for tpu_custom_call.1']
    #allocation4 [shape = 's32[1]{0}', space=sflag, size = 0x4, scoped, tag = 'scoped memory for tpu_custom_call.1']
    #allocation5 [shape = 'u8[4096]{0}', space=vmem, size = 0x1000, scoped, tag = 'input window, operand 1, single buffered']
    #allocation6 [shape = 's32[1]{0}', space=sflag, size = 0x4, scoped, tag = 'scoped memory for tpu_custom_call.1']
    #allocation7 [shape = 'u8[8192]{0}', space=vmem, size = 0x2000, scoped, tag = 'input window, operand 2, single buffered']
    #allocation8 [shape = 'u8[8192]{0}', space=vmem, size = 0x2000, scoped, tag = 'input window, operand 4, single buffered']
    #allocation9 [shape = 's32[1]{0}', space=sflag, size = 0x4, scoped, tag = 'scoped memory for tpu_custom_call.1']
    #allocation10 [shape = 'u8[8192]{0}', space=vmem, size = 0x2000, scoped, tag = 'input window, operand 7, single buffered']
    #allocation11 [shape = 'u8[8192]{0}', space=vmem, size = 0x2000, scoped, tag = 'input window, operand 9, single buffered']
    #allocation12 [shape = 's32[1]{0}', space=sflag, size = 0x4, scoped, tag = 'scoped memory for tpu_custom_call.1']
    #allocation13 [shape = 'u8[4096]{0}', space=vmem, size = 0x1000, scoped, tag = 'output window, operand 0, single buffered']
    #allocation14 [shape = 'u8[4096]{0}', space=vmem, size = 0x1000, scoped, tag = 'output window, operand 1, single buffered']
    #allocation15 [shape = 's32[1]{0}', space=sflag, size = 0x4, scoped, tag = 'scoped memory for tpu_custom_call.1']
    #allocation16 [shape = 'u8[4096]{0}', space=vmem, size = 0x1000, scoped, tag = 'output window, operand 2, single buffered']
    %19 = vsyncpa [#allocation3], 0
    %20 = vsyncpa [#allocation6], 0
    %21 = vsyncpa [#allocation9], 0
    %22 = vsyncpa [#allocation12], 0
    %23 = vsyncpa [#allocation4], 0
    %24 = vsyncpa [#allocation15], 0
    // Predicated region
    $region2: #{tpu_custom_call.1} parent=1 // pred_check
      _
    $region3: #{tpu_custom_call.1} parent=1 // pred_check_branch
      %26 = sbr.rel (0) target = $region5
    $region4: #{tpu_custom_call.1} parent=1 // pred_region
      %28 = vsyncadd [#allocation3], 0
      %s30 = sshll.u32 %s0, 4
      %s31 = int_to_ptr.hbm [resolvable:$true] %s30
      %s32 = sshll.u32 [#allocation2], 4
      %s33 = int_to_ptr.vmem [resolvable:$true] %s32
      %35 = dma.hbm_to_vmem [thread:$0]  %s31, 128, %s33, [#allocation3]
    $region5: #{tpu_custom_call.1} parent=1 // pred_fallthru
      _
    // Predicated region
    $region6: #{tpu_custom_call.1} parent=1 // pred_check
      _
    $region7: #{tpu_custom_call.1} parent=1 // pred_check_branch
      %37 = sbr.rel (0) target = $region9
    $region8: #{tpu_custom_call.1} parent=1 // pred_region
      %39 = vsyncadd [#allocation6], 0
      %s41 = sshll.u32 %s1, 4
      %s42 = int_to_ptr.hbm [resolvable:$true] %s41
      %s43 = sshll.u32 [#allocation5], 4
      %s44 = int_to_ptr.vmem [resolvable:$true] %s43
      %46 = dma.hbm_to_vmem [thread:$0]  %s42, 128, %s44, [#allocation6]
    $region9: #{tpu_custom_call.1} parent=1 // pred_fallthru
      _
    // Predicated region
    $region10: #{tpu_custom_call.1} parent=1 // pred_check
      _
    $region11: #{tpu_custom_call.1} parent=1 // pred_check_branch
      %48 = sbr.rel (0) target = $region13
    $region12: #{tpu_custom_call.1} parent=1 // pred_region
      %50 = vsyncadd [#allocation6], 0
      %s51 = sshll.u32 %s2, 4
      %s52 = int_to_ptr.hbm [resolvable:$true] %s51
      %s53 = sshll.u32 [#allocation7], 4
      %s54 = int_to_ptr.vmem [resolvable:$true] %s53
      %59 = dma.hbm_to_vmem [thread:$0]  %s52, 256, %s54, [#allocation6], 128, 128, 8
    $region13: #{tpu_custom_call.1} parent=1 // pred_fallthru
      _
    // Predicated region
    $region14: #{tpu_custom_call.1} parent=1 // pred_check
      _
    $region15: #{tpu_custom_call.1} parent=1 // pred_check_branch
      %61 = sbr.rel (0) target = $region17
    $region16: #{tpu_custom_call.1} parent=1 // pred_region
      _
    $region17: #{tpu_custom_call.1} parent=1 // pred_fallthru
      _
    // Predicated region
    $region18: #{tpu_custom_call.1} parent=1 // pred_check
      _
    $region19: #{tpu_custom_call.1} parent=1 // pred_check_branch
      %63 = sbr.rel (0) target = $region21
    $region20: #{tpu_custom_call.1} parent=1 // pred_region
      %65 = vsyncadd [#allocation9], 0
      %s66 = sshll.u32 %s4, 4
      %s67 = int_to_ptr.hbm [resolvable:$true] %s66
      %s68 = sshll.u32 [#allocation8], 4
      %s69 = int_to_ptr.vmem [resolvable:$true] %s68
      %74 = dma.hbm_to_vmem [thread:$0]  %s67, 256, %s69, [#allocation9], 128, 128, 8
    $region21: #{tpu_custom_call.1} parent=1 // pred_fallthru
      _
    // Predicated region
    $region22: #{tpu_custom_call.1} parent=1 // pred_check
      _
    $region23: #{tpu_custom_call.1} parent=1 // pred_check_branch
      %76 = sbr.rel (0) target = $region25
    $region24: #{tpu_custom_call.1} parent=1 // pred_region
      _
    $region25: #{tpu_custom_call.1} parent=1 // pred_fallthru
      _
    // Predicated region
    $region26: #{tpu_custom_call.1} parent=1 // pred_check
      _
    $region27: #{tpu_custom_call.1} parent=1 // pred_check_branch
      %78 = sbr.rel (0) target = $region29
    $region28: #{tpu_custom_call.1} parent=1 // pred_region
      _
    $region29: #{tpu_custom_call.1} parent=1 // pred_fallthru
      _
    // Predicated region
    $region30: #{tpu_custom_call.1} parent=1 // pred_check
      _
    $region31: #{tpu_custom_call.1} parent=1 // pred_check_branch
      %80 = sbr.rel (0) target = $region33
    $region32: #{tpu_custom_call.1} parent=1 // pred_region
      %82 = vsyncadd [#allocation9], 0
      %s83 = sshll.u32 %s7, 4
      %s84 = int_to_ptr.hbm [resolvable:$true] %s83
      %s85 = sshll.u32 [#allocation10], 4
      %s86 = int_to_ptr.vmem [resolvable:$true] %s85
      %91 = dma.hbm_to_vmem [thread:$0]  %s84, 256, %s86, [#allocation9], 128, 128, 8
    $region33: #{tpu_custom_call.1} parent=1 // pred_fallthru
      _
    // Predicated region
    $region34: #{tpu_custom_call.1} parent=1 // pred_check
      _
    $region35: #{tpu_custom_call.1} parent=1 // pred_check_branch
      %93 = sbr.rel (0) target = $region37
    $region36: #{tpu_custom_call.1} parent=1 // pred_region
      _
    $region37: #{tpu_custom_call.1} parent=1 // pred_fallthru
      _
    // Predicated region
    $region38: #{tpu_custom_call.1} parent=1 // pred_check
      _
    $region39: #{tpu_custom_call.1} parent=1 // pred_check_branch
      %95 = sbr.rel (0) target = $region41
    $region40: #{tpu_custom_call.1} parent=1 // pred_region
      %97 = vsyncadd [#allocation12], 0
      %s98 = sshll.u32 %s9, 4
      %s99 = int_to_ptr.hbm [resolvable:$true] %s98
      %s100 = sshll.u32 [#allocation11], 4
      %s101 = int_to_ptr.vmem [resolvable:$true] %s100
      %106 = dma.hbm_to_vmem [thread:$0]  %s99, 256, %s101, [#allocation12], 128, 128, 8
    $region41: #{tpu_custom_call.1} parent=1 // pred_fallthru
      _
    // Predicated region
    $region42: #{tpu_custom_call.1} parent=1 // pred_check
      _
    $region43: #{tpu_custom_call.1} parent=1 // pred_check_branch
      %108 = sbr.rel (0) target = $region45
    $region44: #{tpu_custom_call.1} parent=1 // pred_region
      _
    $region45: #{tpu_custom_call.1} parent=1 // pred_fallthru
      _
    // Predicated region
    $region46: #{tpu_custom_call.1} parent=1 // pred_check
      _
    $region47: #{tpu_custom_call.1} parent=1 // pred_check_branch
      %110 = sbr.rel (0) target = $region49
    $region48: #{tpu_custom_call.1} parent=1 // pred_region
      %112 = dma.done [#allocation3], 128
    $region49: #{tpu_custom_call.1} parent=1 // pred_fallthru
      _
    // Predicated region
    $region50: #{tpu_custom_call.1} parent=1 // pred_check
      _
    $region51: #{tpu_custom_call.1} parent=1 // pred_check_branch
      %114 = sbr.rel (0) target = $region53
    $region52: #{tpu_custom_call.1} parent=1 // pred_region
      %116 = dma.done [#allocation6], 128
    $region53: #{tpu_custom_call.1} parent=1 // pred_fallthru
      _
    // Predicated region
    $region54: #{tpu_custom_call.1} parent=1 // pred_check
      _
    $region55: #{tpu_custom_call.1} parent=1 // pred_check_branch
      %118 = sbr.rel (0) target = $region57
    $region56: #{tpu_custom_call.1} parent=1 // pred_region
      %120 = dma.done [#allocation6], 256
    $region57: #{tpu_custom_call.1} parent=1 // pred_fallthru
      _
    // Predicated region
    $region58: #{tpu_custom_call.1} parent=1 // pred_check
      _
    $region59: #{tpu_custom_call.1} parent=1 // pred_check_branch
      %122 = sbr.rel (0) target = $region61
    $region60: #{tpu_custom_call.1} parent=1 // pred_region
      %124 = dma.done [#allocation9], 256
    $region61: #{tpu_custom_call.1} parent=1 // pred_fallthru
      _
    // Predicated region
    $region62: #{tpu_custom_call.1} parent=1 // pred_check
      _
    $region63: #{tpu_custom_call.1} parent=1 // pred_check_branch
      %126 = sbr.rel (0) target = $region65
    $region64: #{tpu_custom_call.1} parent=1 // pred_region
      %128 = dma.done [#allocation9], 256
    $region65: #{tpu_custom_call.1} parent=1 // pred_fallthru
      _
    // Predicated region
    $region66: #{tpu_custom_call.1} parent=1 // pred_check
      _
    $region67: #{tpu_custom_call.1} parent=1 // pred_check_branch
      %130 = sbr.rel (0) target = $region69
    $region68: #{tpu_custom_call.1} parent=1 // pred_region
      %132 = dma.done [#allocation12], 256
    $region69: #{tpu_custom_call.1} parent=1 // pred_fallthru
      _
    %v133 = vld [vmem:[#allocation2] sm:$0xff]
    %v134 = vld [vmem:[#allocation7] sm:$0xff]
    %v135 = vld [vmem:[#allocation7 + $0x8] sm:$0xff]
    %v136 = vld [vmem:[%s3] sm:$0x1]
    %v138 = vperm.slane %v136, 0
    %vm140 = vcmask 130048
    %v142 = vsel %vm140, %v133, 0
    %144 = vmatpush.msra.mxu0 0.0
    %145 = vmatpush.msra.mxu0 0.0
    %146 = vmatpush.msra.mxu0 0.0
    %147 = vmatpush.msra.mxu0 0.0
    %148 = vmatpush.msra.mxu0 0.0
    %149 = vmatpush.msra.mxu0 0.0
    %150 = vmatpush.msra.mxu0 0.0
    %151 = vmatpush.msra.mxu0 0.0
    %152 = vmatpush.msra.mxu0 0.0
    %153 = vmatpush.msra.mxu0 0.0
    %154 = vmatpush.msra.mxu0 0.0
    %155 = vmatpush.msra.mxu0 0.0
    %156 = vmatpush.msra.mxu0 0.0
    %157 = vmatpush.msra.mxu0 0.0
    %158 = vmatpush.msra.mxu0 %v135
    %159 = vmatpush.msra.mxu0 %v134
    %160 = vmatmul.f32.gmra.mxu0 %v142
    %v161 = vpop.f32.mrf.mxu0
    %v162 = vadd.f32 %v138, %v161
    %163 = vdwg.mxu0
    %v164 = vld [vmem:[#allocation5] sm:$0xff]
    %v165 = vld [vmem:[#allocation8] sm:$0xff]
    %v166 = vld [vmem:[#allocation8 + $0x8] sm:$0x3f]
    %vm167 = vcmask 113664
    %v169 = vsel %vm167, %v164, 0
    %vm171 = vcmask 1045504
    %v173 = vsel %vm171, %v166, 0
    %175 = vmatpush.msra.mxu0 0.0
    %176 = vmatpush.msra.mxu0 0.0
    %177 = vmatpush.msra.mxu0 0.0
    %178 = vmatpush.msra.mxu0 0.0
    %179 = vmatpush.msra.mxu0 0.0
    %180 = vmatpush.msra.mxu0 0.0
    %181 = vmatpush.msra.mxu0 0.0
    %182 = vmatpush.msra.mxu0 0.0
    %183 = vmatpush.msra.mxu0 0.0
    %184 = vmatpush.msra.mxu0 0.0
    %185 = vmatpush.msra.mxu0 0.0
    %186 = vmatpush.msra.mxu0 0.0
    %187 = vmatpush.msra.mxu0 0.0
    %188 = vmatpush.msra.mxu0 0.0
    %189 = vmatpush.msra.mxu0 %v173
    %190 = vmatpush.msra.mxu0 %v165
    %191 = vmatmul.f32.gmra.mxu0 %v169
    %v192 = vpop.f32.mrf.mxu0
    %v193 = vadd.f32 0.0, %v192
    %194 = vdwg.mxu0
    %v195 = vadd.f32 %v162, %v193
    %v196 = vld [vmem:[%s5] sm:$0x1]
    %v198 = vperm.slane %v196, 0
    %v200 = vadd.f32 %v195, %v198
    %v201 = vld [vmem:[%s6] sm:$0x1]
    %v203 = vperm.slane %v201, 0
    %v205 = vadd.f32 %v200, %v203
    %vm206 = vcmask 261120
    %207 = vst.msk [vmem:[#allocation13] sm:$0xff] %vm206, %v205
    %v208 = vld [vmem:[#allocation10] sm:$0xff]
    %v209 = vld [vmem:[#allocation10 + $0x8] sm:$0xff]
    %v210 = vld [vmem:[%s8] sm:$0x1]
    %v212 = vperm.slane %v210, 0
    %214 = vmatpush.msra.mxu0 0.0
    %215 = vmatpush.msra.mxu0 0.0
    %216 = vmatpush.msra.mxu0 0.0
    %217 = vmatpush.msra.mxu0 0.0
    %218 = vmatpush.msra.mxu0 0.0
    %219 = vmatpush.msra.mxu0 0.0
    %220 = vmatpush.msra.mxu0 0.0
    %221 = vmatpush.msra.mxu0 0.0
    %222 = vmatpush.msra.mxu0 0.0
    %223 = vmatpush.msra.mxu0 0.0
    %224 = vmatpush.msra.mxu0 0.0
    %225 = vmatpush.msra.mxu0 0.0
    %226 = vmatpush.msra.mxu0 0.0
    %227 = vmatpush.msra.mxu0 0.0
    %228 = vmatpush.msra.mxu0 %v209
    %229 = vmatpush.msra.mxu0 %v208
    %230 = vmatmul.f32.gmra.mxu0 %v142
    %v231 = vpop.f32.mrf.mxu0
    %v232 = vadd.f32 %v212, %v231
    %233 = vdwg.mxu0
    %234 = vst.msk [vmem:[#allocation14] sm:$0xff] %vm206, %v232
    %v235 = vld [vmem:[#allocation11] sm:$0xff]
    %v236 = vld [vmem:[#allocation11 + $0x8] sm:$0xff]
    %v237 = vld [vmem:[%s10] sm:$0x1]
    %v239 = vperm.slane %v237, 0
    %241 = vmatpush.msra.mxu0 0.0
    %242 = vmatpush.msra.mxu0 0.0
    %243 = vmatpush.msra.mxu0 0.0
    %244 = vmatpush.msra.mxu0 0.0
    %245 = vmatpush.msra.mxu0 0.0
    %246 = vmatpush.msra.mxu0 0.0
    %247 = vmatpush.msra.mxu0 0.0
    %248 = vmatpush.msra.mxu0 0.0
    %249 = vmatpush.msra.mxu0 0.0
    %250 = vmatpush.msra.mxu0 0.0
    %251 = vmatpush.msra.mxu0 0.0
    %252 = vmatpush.msra.mxu0 0.0
    %253 = vmatpush.msra.mxu0 0.0
    %254 = vmatpush.msra.mxu0 0.0
    %255 = vmatpush.msra.mxu0 %v236
    %256 = vmatpush.msra.mxu0 %v235
    %257 = vmatmul.f32.gmra.mxu0 %v142
    %v258 = vpop.f32.mrf.mxu0
    %v259 = vadd.f32 %v239, %v258
    %260 = vdwg.mxu0
    %261 = vst.msk [vmem:[#allocation16] sm:$0xff] %vm206, %v259
    // Predicated region
    $region70: #{tpu_custom_call.1} parent=1 // pred_check
      _
    $region71: #{tpu_custom_call.1} parent=1 // pred_check_branch
      %263 = sbr.rel (0) target = $region73
    $region72: #{tpu_custom_call.1} parent=1 // pred_region
      %265 = vsyncadd [#allocation4], 0
      %s267 = sshll.u32 [#allocation13], 4
      %s268 = int_to_ptr.vmem [resolvable:$true] %s267
      %s269 = sshll.u32 %s11, 4
      %s270 = int_to_ptr.hbm [resolvable:$true] %s269
      %272 = dma.vmem_to_hbm [thread:$0]  %s268, 128, %s270, [#allocation4]
    $region73: #{tpu_custom_call.1} parent=1 // pred_fallthru
      _
    // Predicated region
    $region74: #{tpu_custom_call.1} parent=1 // pred_check
      _
    $region75: #{tpu_custom_call.1} parent=1 // pred_check_branch
      %274 = sbr.rel (0) target = $region77
    $region76: #{tpu_custom_call.1} parent=1 // pred_region
      %276 = vsyncadd [#allocation15], 0
      %s278 = sshll.u32 [#allocation14], 4
      %s279 = int_to_ptr.vmem [resolvable:$true] %s278
      %s280 = sshll.u32 %s12, 4
      %s281 = int_to_ptr.hbm [resolvable:$true] %s280
      %283 = dma.vmem_to_hbm [thread:$0]  %s279, 128, %s281, [#allocation15]
    $region77: #{tpu_custom_call.1} parent=1 // pred_fallthru
      _
    // Predicated region
    $region78: #{tpu_custom_call.1} parent=1 // pred_check
      _
    $region79: #{tpu_custom_call.1} parent=1 // pred_check_branch
      %285 = sbr.rel (0) target = $region81
    $region80: #{tpu_custom_call.1} parent=1 // pred_region
      %287 = vsyncadd [#allocation15], 0
      %s289 = sshll.u32 [#allocation16], 4
      %s290 = int_to_ptr.vmem [resolvable:$true] %s289
      %s291 = sshll.u32 %s13, 4
      %s292 = int_to_ptr.hbm [resolvable:$true] %s291
      %294 = dma.vmem_to_hbm [thread:$0]  %s290, 128, %s292, [#allocation15]
    $region81: #{tpu_custom_call.1} parent=1 // pred_fallthru
      _
    // Predicated region
    $region82: #{tpu_custom_call.1} parent=1 // pred_check
      _
    $region83: #{tpu_custom_call.1} parent=1 // pred_check_branch
      %296 = sbr.rel (0) target = $region85
    $region84: #{tpu_custom_call.1} parent=1 // pred_region
      %298 = dma.done [#allocation4], 128
    $region85: #{tpu_custom_call.1} parent=1 // pred_fallthru
      _
    // Predicated region
    $region86: #{tpu_custom_call.1} parent=1 // pred_check
      _
    $region87: #{tpu_custom_call.1} parent=1 // pred_check_branch
      %300 = sbr.rel (0) target = $region89
    $region88: #{tpu_custom_call.1} parent=1 // pred_region
      %302 = dma.done [#allocation15], 128
    $region89: #{tpu_custom_call.1} parent=1 // pred_fallthru
      _
    // Predicated region
    $region90: #{tpu_custom_call.1} parent=1 // pred_check
      _
    $region91: #{tpu_custom_call.1} parent=1 // pred_check_branch
      %304 = sbr.rel (0) target = $region93
    $region92: #{tpu_custom_call.1} parent=1 // pred_region
      %306 = dma.done [#allocation15], 128
    $region93: #{tpu_custom_call.1} parent=1 // pred_fallthru
      _
    %307 = vsyncpa [#allocation3], 1
    %308 = vsyncpa [#allocation6], 1
    %309 = vsyncpa [#allocation9], 1
    %310 = vsyncpa [#allocation12], 1
    %311 = vsyncpa [#allocation4], 1
    %312 = vsyncpa [#allocation15], 1

</llo_original>
